<compile_context>
chip_gen: v5e
topology: v5e:2x2
jax: 0.10.0
libtpu: 0.0.40
codegen_flags: <defaults>
</compile_context>

<pallas_src>
import numpy as np
import jax
import jax.numpy as jnp
from jax.experimental import pallas as pl
from jax.experimental.pallas import tpu as pltpu

_LANE = 128       # TPU vreg lane width; edges are folded onto lanes in the output
_MIN_TILE = 1024  # keeps tb = tile_edges/128 a multiple of 8 (output sublane tiling)


def _u_dot_v_kernel(u_ref, v_ref, o_ref):
    # u_ref, v_ref: (tb, 128, D) -- axis 1 indexes edges (becomes the lane axis
    # of the output), axis 2 is the feature dim (input lanes, reduced).
    # o_ref: (tb, 128) lane-dense per-edge dot products (full, unmasked vst).
    prod = u_ref[...].astype(jnp.float32) * v_ref[...].astype(jnp.float32)
    o_ref[...] = jnp.sum(prod, axis=-1)


def _choose_tile_edges(E, D, itemsize, target_block_bytes=4 << 20):
    """Edges per grid step, sized off the *VMEM* block cost (lane padding incl.)."""
    lane_D = pl.cdiv(max(D, 1), _LANE) * _LANE          # lane-padded feature width
    per_edge_vmem = lane_D * itemsize
    tile = max((target_block_bytes // per_edge_vmem) // _MIN_TILE * _MIN_TILE,
               _MIN_TILE)
    # Don't pad far beyond E.
    tile = min(tile, pl.cdiv(E, _MIN_TILE) * _MIN_TILE)
    # Keep >= 2 grid steps when there's enough work so the "parallel" edge axis
    # can shard across v7x's two TensorCores (free no-op on 1-TC v5e/v6e).
    if E > 2 * _MIN_TILE:
        tile = min(tile, pl.cdiv(E, 2 * _MIN_TILE) * _MIN_TILE)
    return int(max(tile, _MIN_TILE))
    # TODO(synk): for very large D (>= ~4096 f32) the 1024-edge minimum tile
    # exceeds the ~8 MiB/buffer target on v7x's 64 MiB VMEM; would need a
    # different output layout to shrink the edge tile below 1024.


def edge_u_dot_v(ufeat, ifeat, edge_src, edge_dst):
    """out[e, 0] = <ufeat[edge_src[e]], ifeat[edge_dst[e]]>, f32, shape (E, 1)."""
    E = edge_src.shape[0]
    assert edge_dst.shape == (E,)
    D = ufeat.shape[1]
    assert ifeat.shape[1] == D
    assert ufeat.dtype == ifeat.dtype
    itemsize = np.dtype(ufeat.dtype).itemsize

    tile_edges = _choose_tile_edges(E, D, itemsize)
    num_tiles = pl.cdiv(E, tile_edges)
    E_pad = num_tiles * tile_edges

    # Pad the cheap index vectors (index 0 is always valid); padded rows are
    # sliced off the output, so their dot values never matter.
    if E_pad != E:
        edge_src = jnp.pad(edge_src, (0, E_pad - E))
        edge_dst = jnp.pad(edge_dst, (0, E_pad - E))

    # Contiguous row gather stays in XLA (see TODO above); it emits E_pad rows
    # directly in the kernel's streaming layout.
    u_edge = jnp.take(ufeat, edge_src, axis=0)
    i_edge = jnp.take(ifeat, edge_dst, axis=0)

    rows = E_pad // _LANE
    tb = tile_edges // _LANE
    # Free contiguous reshape: edge e -> (row e // 128, lane e % 128).
    u3 = u_edge.reshape(rows, _LANE, D)
    i3 = i_edge.reshape(rows, _LANE, D)

    lane_D = pl.cdiv(D, _LANE) * _LANE
    in_block_bytes = tb * _LANE * lane_D * itemsize      # VMEM bytes per input block
    out_block_bytes = tb * _LANE * 4
    vmem_need = 4 * in_block_bytes + 2 * out_block_bytes + (4 << 20)

    cost = pl.CostEstimate(
        flops=2 * E_pad * D,
        transcendentals=0,
        bytes_accessed=2 * E_pad * D * itemsize + E_pad * 4,
    )
    cparams = pltpu.CompilerParams(
        dimension_semantics=("parallel",),               # megacore-shardable edge axis
        vmem_limit_bytes=int(max(32 << 20, vmem_need)),
    )

    out2d = pl.pallas_call(
        _u_dot_v_kernel,
        out_shape=jax.ShapeDtypeStruct((rows, _LANE), jnp.float32),
        grid_spec=pltpu.PrefetchScalarGridSpec(
            num_scalar_prefetch=0,
            grid=(num_tiles,),
            in_specs=[
                pl.BlockSpec((tb, _LANE, D), lambda i: (i, 0, 0)),
                pl.BlockSpec((tb, _LANE, D), lambda i: (i, 0, 0)),
            ],
            out_specs=pl.BlockSpec((tb, _LANE), lambda i: (i, 0)),
        ),
        compiler_params=cparams,
        cost_estimate=cost,
    )(u3, i3)

    return out2d.reshape(E_pad, 1)[:E]


class DotProductPallas:
    """JAX/Pallas port of the GCMC DotProduct module (forward pass)."""

    def __init__(self, src_in_units, dst_in_units, key, stream_dtype=None):
        # th.randn(dst_in_units, dst_in_units) -> deterministic normal init.
        # Q is only used by .inference(), never by forward().
        self.Q = jax.random.normal(key, (dst_in_units, dst_in_units),
                                   dtype=jnp.float32)
        # Optional reduced-precision HBM streaming dtype (e.g. jnp.bfloat16):
        # the tiny node tables are cast before the gather, halving the dominant
        # HBM traffic; accumulation stays f32 inside the kernel.
        self.stream_dtype = stream_dtype
        # TODO(synk): nn.Dropout(0.1) is declared in __init__ but never applied
        # in forward(); omitted here.

    def forward(self, edge_src, edge_dst, ufeat, ifeat):
        if self.stream_dtype is not None:
            ufeat = ufeat.astype(self.stream_dtype)
            ifeat = ifeat.astype(self.stream_dtype)
        return edge_u_dot_v(ufeat, ifeat, edge_src, edge_dst)

    def inference(self, uidfeat, ifeat):
        return uidfeat @ self.Q @ ifeat.T


if __name__ == "__main__":
    key = jax.random.PRNGKey(0)
    k_q, k_u, k_i, k_es, k_ed = jax.random.split(key, 5)

    num_users, num_items, D = 16, 24, 32
    num_edges = 200  # not a tile multiple -> exercises the index-padding path

    ufeat = jax.random.normal(k_u, (num_users, D), dtype=jnp.float32)
    ifeat = jax.random.normal(k_i, (num_items, D), dtype=jnp.float32)
    edge_src = jax.random.randint(k_es, (num_edges,), 0, num_users)
    edge_dst = jax.random.randint(k_ed, (num_edges,), 0, num_items)

    # Reference (pure JAX) u_dot_v semantics.
    ref = jnp.sum(ufeat[edge_src] * ifeat[edge_dst], axis=-1, keepdims=True)

    # 1) Default f32 path, under jit (no host syncs inside the wrapper).
    module = DotProductPallas(src_in_units=D, dst_in_units=D, key=k_q)
    out = jax.jit(module.forward)(edge_src, edge_dst, ufeat, ifeat)
    out = jax.block_until_ready(out)
    assert out.shape == (num_edges, 1) and out.dtype == jnp.float32
    np.testing.assert_allclose(np.asarray(out), np.asarray(ref),
                               rtol=1e-5, atol=1e-5)

    # 2) bf16-streaming path (bandwidth win on v6e/v7x); compare against a
    #    bf16-cast reference since inputs are intentionally rounded.
    module_bf16 = DotProductPallas(src_in_units=D, dst_in_units=D, key=k_q,
                                   stream_dtype=jnp.bfloat16)
    out_bf16 = jax.block_until_ready(
        jax.jit(module_bf16.forward)(edge_src, edge_dst, ufeat, ifeat))
    uf_b = ufeat.astype(jnp.bfloat16).astype(jnp.float32)
    if_b = ifeat.astype(jnp.bfloat16).astype(jnp.float32)
    ref_bf16 = jnp.sum(uf_b[edge_src] * if_b[edge_dst], axis=-1, keepdims=True)
    np.testing.assert_allclose(np.asarray(out_bf16), np.asarray(ref_bf16),
                               rtol=1e-4, atol=1e-4)

    print("KERNEL_OK")
</pallas_src>

<mosaic_0001>
module attributes {stable_mosaic.version = 11 : i64} {
  func.func @_u_dot_v_kernel(%arg0: i32, %arg1: memref<8x128x32xf32, #tpu.memory_space<vmem>>, %arg2: memref<8x128x32xf32, #tpu.memory_space<vmem>>, %arg3: memref<8x128xf32, #tpu.memory_space<vmem>>) attributes {dimension_semantics = [#tpu.dimension_semantics<parallel>], iteration_bounds = array<i64: 1>, scalar_prefetch = 0 : i64, scratch_operands = 0 : i64, tpu.core_type = #tpu.core_type<tc>, window_params = [{transform_indices = @transform_0, window_bounds = array<i64: 8, 128, 32>}, {transform_indices = @transform_1, window_bounds = array<i64: 8, 128, 32>}, {transform_indices = @transform_2, window_bounds = array<i64: 8, 128>}]} {
    %c0 = arith.constant 0 : index
    %c0_0 = arith.constant 0 : index
    %c0_1 = arith.constant 0 : index
    %0 = vector.load %arg1[%c0, %c0_0, %c0_1] : memref<8x128x32xf32, #tpu.memory_space<vmem>>, vector<8x128x32xf32>
    %c0_2 = arith.constant 0 : index
    %c0_3 = arith.constant 0 : index
    %c0_4 = arith.constant 0 : index
    %1 = vector.load %arg2[%c0_2, %c0_3, %c0_4] : memref<8x128x32xf32, #tpu.memory_space<vmem>>, vector<8x128x32xf32>
    %2 = arith.mulf %0, %1 : vector<8x128x32xf32>
    %cst = arith.constant dense<0.000000e+00> : vector<8x128xf32>
    %3 = vector.multi_reduction <add>, %2, %cst [2] : vector<8x128x32xf32> to vector<8x128xf32>
    %c0_5 = arith.constant 0 : index
    %c0_6 = arith.constant 0 : index
    %4 = vector.load %arg3[%c0_5, %c0_6] : memref<8x128xf32, #tpu.memory_space<vmem>>, vector<8x128xf32>
    tpu.vector_store %arg3[%c0_5, %c0_6], %3 {strides = array<i32>} : memref<8x128xf32, #tpu.memory_space<vmem>>, vector<8x128xf32>,
    return
  }
  func.func @transform_0(%arg0: i32) -> (i32, i32, i32) {
    %c0_i32 = arith.constant 0 : i32
    %c0_i32_0 = arith.constant 0 : i32
    %c0_i32_1 = arith.constant 0 : i32
    return %arg0, %c0_i32, %c0_i32_0 : i32, i32, i32
  }
  func.func @transform_1(%arg0: i32) -> (i32, i32, i32) {
    %c0_i32 = arith.constant 0 : i32
    %c0_i32_0 = arith.constant 0 : i32
    %c0_i32_1 = arith.constant 0 : i32
    return %arg0, %c0_i32, %c0_i32_0 : i32, i32, i32
  }
  func.func @transform_2(%arg0: i32) -> (i32, i32) {
    %c0_i32 = arith.constant 0 : i32
    %c0_i32_0 = arith.constant 0 : i32
    return %arg0, %c0_i32 : i32, i32
  }
}

</mosaic_0001>

<llo_original>
// kernel: forward.1
$region0: #{forward.1}
  #allocation0 [shape = 'u32[]', space=smem, size = 0x4, offset = 0x4, fixed_abs, tag = 'smem constant byte address 0x4 - core index']
  #allocation1 [shape = 'u32[72,128]{1,0:T(1,128)}', space=vmem, size = 0x9000, scoped, tag = 'internal scratch']
  %s0 = inlined_call_operand.vmem [shape: f32[8,128,32], index: 0, kind: input, shape index: {}]
  %s1 = inlined_call_operand.vmem [shape: f32[8,128,32], index: 1, kind: input, shape index: {}]
  %s2 = inlined_call_operand.vmem [shape: f32[8,128], index: 2, kind: output, shape index: {}]
  %s3 = sld [smem:[#allocation0]]
  $region18: #{forward.1} parent=0
    _
  %s5 = ssub.s32 1, %s3
  %s6 = scalar_select 0, %s5, %s3
  // Predicated region
  $region2: #{forward.1} parent=0 // pred_check
    _
  $region3: #{forward.1} parent=0 // pred_check_branch
    %8 = sbr.rel (0) target = $region5
  $region4: #{forward.1} parent=0 // pred_region
    _
  $region5: #{forward.1} parent=0 // pred_fallthru
    _
  // Predicated region
  $region6: #{forward.1} parent=0 // pred_check
    _
  $region7: #{forward.1} parent=0 // pred_check_branch
    %10 = sbr.rel (0) target = $region9
  $region8: #{forward.1} parent=0 // pred_region
    _
  $region9: #{forward.1} parent=0 // pred_fallthru
    _
  %v11 = vld [vmem:[%s0] sm:$0xff]
  %v12 = vld [vmem:[%s0 + $0x8] sm:$0xff]
  %v13 = vld [vmem:[%s0 + $0x10] sm:$0xff]
  %v14 = vld [vmem:[%s0 + $0x18] sm:$0xff]
  %v15 = vld [vmem:[%s0 + $0x20] sm:$0xff]
  %v16 = vld [vmem:[%s0 + $0x28] sm:$0xff]
  %v17 = vld [vmem:[%s0 + $0x30] sm:$0xff]
  %v18 = vld [vmem:[%s0 + $0x38] sm:$0xff]
  %v19 = vld [vmem:[%s0 + $0x40] sm:$0xff]
  %v20 = vld [vmem:[%s0 + $0x48] sm:$0xff]
  %v21 = vld [vmem:[%s0 + $0x50] sm:$0xff]
  %v22 = vld [vmem:[%s0 + $0x58] sm:$0xff]
  %v23 = vld [vmem:[%s0 + $0x60] sm:$0xff]
  %v24 = vld [vmem:[%s0 + $0x68] sm:$0xff]
  %v25 = vld [vmem:[%s0 + $0x70] sm:$0xff]
  %v26 = vld [vmem:[%s0 + $0x78] sm:$0xff]
  %v27 = vld [vmem:[%s0 + $0x80] sm:$0xff]
  %v28 = vld [vmem:[%s0 + $0x88] sm:$0xff]
  %v29 = vld [vmem:[%s0 + $0x90] sm:$0xff]
  %v30 = vld [vmem:[%s0 + $0x98] sm:$0xff]
  %v31 = vld [vmem:[%s0 + $0xa0] sm:$0xff]
  %v32 = vld [vmem:[%s0 + $0xa8] sm:$0xff]
  %v33 = vld [vmem:[%s0 + $0xb0] sm:$0xff]
  %v34 = vld [vmem:[%s0 + $0xb8] sm:$0xff]
  %v35 = vld [vmem:[%s0 + $0xc0] sm:$0xff]
  %v36 = vld [vmem:[%s0 + $0xc8] sm:$0xff]
  %v37 = vld [vmem:[%s0 + $0xd0] sm:$0xff]
  %v38 = vld [vmem:[%s0 + $0xd8] sm:$0xff]
  %v39 = vld [vmem:[%s0 + $0xe0] sm:$0xff]
  %v40 = vld [vmem:[%s0 + $0xe8] sm:$0xff]
  %v41 = vld [vmem:[%s0 + $0xf0] sm:$0xff]
  %v42 = vld [vmem:[%s0 + $0xf8] sm:$0xff]
  %v43 = vld [vmem:[%s0 + $0x100] sm:$0xff]
  %v44 = vld [vmem:[%s0 + $0x108] sm:$0xff]
  %v45 = vld [vmem:[%s0 + $0x110] sm:$0xff]
  %v46 = vld [vmem:[%s0 + $0x118] sm:$0xff]
  %v47 = vld [vmem:[%s0 + $0x120] sm:$0xff]
  %v48 = vld [vmem:[%s0 + $0x128] sm:$0xff]
  %v49 = vld [vmem:[%s0 + $0x130] sm:$0xff]
  %v50 = vld [vmem:[%s0 + $0x138] sm:$0xff]
  %v51 = vld [vmem:[%s0 + $0x140] sm:$0xff]
  %v52 = vld [vmem:[%s0 + $0x148] sm:$0xff]
  %v53 = vld [vmem:[%s0 + $0x150] sm:$0xff]
  %v54 = vld [vmem:[%s0 + $0x158] sm:$0xff]
  %v55 = vld [vmem:[%s0 + $0x160] sm:$0xff]
  %v56 = vld [vmem:[%s0 + $0x168] sm:$0xff]
  %v57 = vld [vmem:[%s0 + $0x170] sm:$0xff]
  %v58 = vld [vmem:[%s0 + $0x178] sm:$0xff]
  %v59 = vld [vmem:[%s0 + $0x180] sm:$0xff]
  %v60 = vld [vmem:[%s0 + $0x188] sm:$0xff]
  %v61 = vld [vmem:[%s0 + $0x190] sm:$0xff]
  %v62 = vld [vmem:[%s0 + $0x198] sm:$0xff]
  %v63 = vld [vmem:[%s0 + $0x1a0] sm:$0xff]
  %v64 = vld [vmem:[%s0 + $0x1a8] sm:$0xff]
  %v65 = vld [vmem:[%s0 + $0x1b0] sm:$0xff]
  %v66 = vld [vmem:[%s0 + $0x1b8] sm:$0xff]
  %v67 = vld [vmem:[%s0 + $0x1c0] sm:$0xff]
  %v68 = vld [vmem:[%s0 + $0x1c8] sm:$0xff]
  %v69 = vld [vmem:[%s0 + $0x1d0] sm:$0xff]
  %v70 = vld [vmem:[%s0 + $0x1d8] sm:$0xff]
  %v71 = vld [vmem:[%s0 + $0x1e0] sm:$0xff]
  %v72 = vld [vmem:[%s0 + $0x1e8] sm:$0xff]
  %v73 = vld [vmem:[%s0 + $0x1f0] sm:$0xff]
  %v74 = vld [vmem:[%s0 + $0x1f8] sm:$0xff]
  %v75 = vld [vmem:[%s0 + $0x200] sm:$0xff]
  %v76 = vld [vmem:[%s0 + $0x208] sm:$0xff]
  %v77 = vld [vmem:[%s0 + $0x210] sm:$0xff]
  %v78 = vld [vmem:[%s0 + $0x218] sm:$0xff]
  %v79 = vld [vmem:[%s0 + $0x220] sm:$0xff]
  %v80 = vld [vmem:[%s0 + $0x228] sm:$0xff]
  %v81 = vld [vmem:[%s0 + $0x230] sm:$0xff]
  %v82 = vld [vmem:[%s0 + $0x238] sm:$0xff]
  %v83 = vld [vmem:[%s0 + $0x240] sm:$0xff]
  %v84 = vld [vmem:[%s0 + $0x248] sm:$0xff]
  %v85 = vld [vmem:[%s0 + $0x250] sm:$0xff]
  %v86 = vld [vmem:[%s0 + $0x258] sm:$0xff]
  %v87 = vld [vmem:[%s0 + $0x260] sm:$0xff]
  %v88 = vld [vmem:[%s0 + $0x268] sm:$0xff]
  %v89 = vld [vmem:[%s0 + $0x270] sm:$0xff]
  %v90 = vld [vmem:[%s0 + $0x278] sm:$0xff]
  %v91 = vld [vmem:[%s0 + $0x280] sm:$0xff]
  %v92 = vld [vmem:[%s0 + $0x288] sm:$0xff]
  %v93 = vld [vmem:[%s0 + $0x290] sm:$0xff]
  %v94 = vld [vmem:[%s0 + $0x298] sm:$0xff]
  %v95 = vld [vmem:[%s0 + $0x2a0] sm:$0xff]
  %v96 = vld [vmem:[%s0 + $0x2a8] sm:$0xff]
  %v97 = vld [vmem:[%s0 + $0x2b0] sm:$0xff]
  %v98 = vld [vmem:[%s0 + $0x2b8] sm:$0xff]
  %v99 = vld [vmem:[%s0 + $0x2c0] sm:$0xff]
  %v100 = vld [vmem:[%s0 + $0x2c8] sm:$0xff]
  %v101 = vld [vmem:[%s0 + $0x2d0] sm:$0xff]
  %v102 = vld [vmem:[%s0 + $0x2d8] sm:$0xff]
  %v103 = vld [vmem:[%s0 + $0x2e0] sm:$0xff]
  %v104 = vld [vmem:[%s0 + $0x2e8] sm:$0xff]
  %v105 = vld [vmem:[%s0 + $0x2f0] sm:$0xff]
  %v106 = vld [vmem:[%s0 + $0x2f8] sm:$0xff]
  %v107 = vld [vmem:[%s0 + $0x300] sm:$0xff]
  %v108 = vld [vmem:[%s0 + $0x308] sm:$0xff]
  %v109 = vld [vmem:[%s0 + $0x310] sm:$0xff]
  %v110 = vld [vmem:[%s0 + $0x318] sm:$0xff]
  %v111 = vld [vmem:[%s0 + $0x320] sm:$0xff]
  %v112 = vld [vmem:[%s0 + $0x328] sm:$0xff]
  %v113 = vld [vmem:[%s0 + $0x330] sm:$0xff]
  %v114 = vld [vmem:[%s0 + $0x338] sm:$0xff]
  %v115 = vld [vmem:[%s0 + $0x340] sm:$0xff]
  %v116 = vld [vmem:[%s0 + $0x348] sm:$0xff]
  %v117 = vld [vmem:[%s0 + $0x350] sm:$0xff]
  %v118 = vld [vmem:[%s0 + $0x358] sm:$0xff]
  %v119 = vld [vmem:[%s0 + $0x360] sm:$0xff]
  %v120 = vld [vmem:[%s0 + $0x368] sm:$0xff]
  %v121 = vld [vmem:[%s0 + $0x370] sm:$0xff]
  %v122 = vld [vmem:[%s0 + $0x378] sm:$0xff]
  %v123 = vld [vmem:[%s0 + $0x380] sm:$0xff]
  %v124 = vld [vmem:[%s0 + $0x388] sm:$0xff]
  %v125 = vld [vmem:[%s0 + $0x390] sm:$0xff]
  %v126 = vld [vmem:[%s0 + $0x398] sm:$0xff]
  %v127 = vld [vmem:[%s0 + $0x3a0] sm:$0xff]
  %v128 = vld [vmem:[%s0 + $0x3a8] sm:$0xff]
  %v129 = vld [vmem:[%s0 + $0x3b0] sm:$0xff]
  %v130 = vld [vmem:[%s0 + $0x3b8] sm:$0xff]
  %v131 = vld [vmem:[%s0 + $0x3c0] sm:$0xff]
  %v132 = vld [vmem:[%s0 + $0x3c8] sm:$0xff]
  %v133 = vld [vmem:[%s0 + $0x3d0] sm:$0xff]
  %v134 = vld [vmem:[%s0 + $0x3d8] sm:$0xff]
  %v135 = vld [vmem:[%s0 + $0x3e0] sm:$0xff]
  %v136 = vld [vmem:[%s0 + $0x3e8] sm:$0xff]
  %v137 = vld [vmem:[%s0 + $0x3f0] sm:$0xff]
  %v138 = vld [vmem:[%s0 + $0x3f8] sm:$0xff]
  %v139 = vld [vmem:[%s1] sm:$0xff]
  %v140 = vld [vmem:[%s1 + $0x8] sm:$0xff]
  %v141 = vld [vmem:[%s1 + $0x10] sm:$0xff]
  %v142 = vld [vmem:[%s1 + $0x18] sm:$0xff]
  %v143 = vld [vmem:[%s1 + $0x20] sm:$0xff]
  %v144 = vld [vmem:[%s1 + $0x28] sm:$0xff]
  %v145 = vld [vmem:[%s1 + $0x30] sm:$0xff]
  %v146 = vld [vmem:[%s1 + $0x38] sm:$0xff]
  %v147 = vld [vmem:[%s1 + $0x40] sm:$0xff]
  %v148 = vld [vmem:[%s1 + $0x48] sm:$0xff]
  %v149 = vld [vmem:[%s1 + $0x50] sm:$0xff]
  %v150 = vld [vmem:[%s1 + $0x58] sm:$0xff]
  %v151 = vld [vmem:[%s1 + $0x60] sm:$0xff]
  %v152 = vld [vmem:[%s1 + $0x68] sm:$0xff]
  %v153 = vld [vmem:[%s1 + $0x70] sm:$0xff]
  %v154 = vld [vmem:[%s1 + $0x78] sm:$0xff]
  %v155 = vld [vmem:[%s1 + $0x80] sm:$0xff]
  %v156 = vld [vmem:[%s1 + $0x88] sm:$0xff]
  %v157 = vld [vmem:[%s1 + $0x90] sm:$0xff]
  %v158 = vld [vmem:[%s1 + $0x98] sm:$0xff]
  %v159 = vld [vmem:[%s1 + $0xa0] sm:$0xff]
  %v160 = vld [vmem:[%s1 + $0xa8] sm:$0xff]
  %v161 = vld [vmem:[%s1 + $0xb0] sm:$0xff]
  %v162 = vld [vmem:[%s1 + $0xb8] sm:$0xff]
  %v163 = vld [vmem:[%s1 + $0xc0] sm:$0xff]
  %v164 = vld [vmem:[%s1 + $0xc8] sm:$0xff]
  %v165 = vld [vmem:[%s1 + $0xd0] sm:$0xff]
  %v166 = vld [vmem:[%s1 + $0xd8] sm:$0xff]
  %v167 = vld [vmem:[%s1 + $0xe0] sm:$0xff]
  %v168 = vld [vmem:[%s1 + $0xe8] sm:$0xff]
  %v169 = vld [vmem:[%s1 + $0xf0] sm:$0xff]
  %v170 = vld [vmem:[%s1 + $0xf8] sm:$0xff]
  %v171 = vld [vmem:[%s1 + $0x100] sm:$0xff]
  %v172 = vld [vmem:[%s1 + $0x108] sm:$0xff]
  %v173 = vld [vmem:[%s1 + $0x110] sm:$0xff]
  %v174 = vld [vmem:[%s1 + $0x118] sm:$0xff]
  %v175 = vld [vmem:[%s1 + $0x120] sm:$0xff]
  %v176 = vld [vmem:[%s1 + $0x128] sm:$0xff]
  %v177 = vld [vmem:[%s1 + $0x130] sm:$0xff]
  %v178 = vld [vmem:[%s1 + $0x138] sm:$0xff]
  %v179 = vld [vmem:[%s1 + $0x140] sm:$0xff]
  %v180 = vld [vmem:[%s1 + $0x148] sm:$0xff]
  %v181 = vld [vmem:[%s1 + $0x150] sm:$0xff]
  %v182 = vld [vmem:[%s1 + $0x158] sm:$0xff]
  %v183 = vld [vmem:[%s1 + $0x160] sm:$0xff]
  %v184 = vld [vmem:[%s1 + $0x168] sm:$0xff]
  %v185 = vld [vmem:[%s1 + $0x170] sm:$0xff]
  %v186 = vld [vmem:[%s1 + $0x178] sm:$0xff]
  %v187 = vld [vmem:[%s1 + $0x180] sm:$0xff]
  %v188 = vld [vmem:[%s1 + $0x188] sm:$0xff]
  %v189 = vld [vmem:[%s1 + $0x190] sm:$0xff]
  %v190 = vld [vmem:[%s1 + $0x198] sm:$0xff]
  %v191 = vld [vmem:[%s1 + $0x1a0] sm:$0xff]
  %v192 = vld [vmem:[%s1 + $0x1a8] sm:$0xff]
  %v193 = vld [vmem:[%s1 + $0x1b0] sm:$0xff]
  %v194 = vld [vmem:[%s1 + $0x1b8] sm:$0xff]
  %v195 = vld [vmem:[%s1 + $0x1c0] sm:$0xff]
  %v196 = vld [vmem:[%s1 + $0x1c8] sm:$0xff]
  %v197 = vld [vmem:[%s1 + $0x1d0] sm:$0xff]
  %v198 = vld [vmem:[%s1 + $0x1d8] sm:$0xff]
  %v199 = vld [vmem:[%s1 + $0x1e0] sm:$0xff]
  %v200 = vld [vmem:[%s1 + $0x1e8] sm:$0xff]
  %v201 = vld [vmem:[%s1 + $0x1f0] sm:$0xff]
  %v202 = vld [vmem:[%s1 + $0x1f8] sm:$0xff]
  %v203 = vld [vmem:[%s1 + $0x200] sm:$0xff]
  %v204 = vld [vmem:[%s1 + $0x208] sm:$0xff]
  %v205 = vld [vmem:[%s1 + $0x210] sm:$0xff]
  %v206 = vld [vmem:[%s1 + $0x218] sm:$0xff]
  %v207 = vld [vmem:[%s1 + $0x220] sm:$0xff]
  %v208 = vld [vmem:[%s1 + $0x228] sm:$0xff]
  %v209 = vld [vmem:[%s1 + $0x230] sm:$0xff]
  %v210 = vld [vmem:[%s1 + $0x238] sm:$0xff]
  %v211 = vld [vmem:[%s1 + $0x240] sm:$0xff]
  %v212 = vld [vmem:[%s1 + $0x248] sm:$0xff]
  %v213 = vld [vmem:[%s1 + $0x250] sm:$0xff]
  %v214 = vld [vmem:[%s1 + $0x258] sm:$0xff]
  %v215 = vld [vmem:[%s1 + $0x260] sm:$0xff]
  %v216 = vld [vmem:[%s1 + $0x268] sm:$0xff]
  %v217 = vld [vmem:[%s1 + $0x270] sm:$0xff]
  %v218 = vld [vmem:[%s1 + $0x278] sm:$0xff]
  %v219 = vld [vmem:[%s1 + $0x280] sm:$0xff]
  %v220 = vld [vmem:[%s1 + $0x288] sm:$0xff]
  %v221 = vld [vmem:[%s1 + $0x290] sm:$0xff]
  %v222 = vld [vmem:[%s1 + $0x298] sm:$0xff]
  %v223 = vld [vmem:[%s1 + $0x2a0] sm:$0xff]
  %v224 = vld [vmem:[%s1 + $0x2a8] sm:$0xff]
  %v225 = vld [vmem:[%s1 + $0x2b0] sm:$0xff]
  %v226 = vld [vmem:[%s1 + $0x2b8] sm:$0xff]
  %v227 = vld [vmem:[%s1 + $0x2c0] sm:$0xff]
  %v228 = vld [vmem:[%s1 + $0x2c8] sm:$0xff]
  %v229 = vld [vmem:[%s1 + $0x2d0] sm:$0xff]
  %v230 = vld [vmem:[%s1 + $0x2d8] sm:$0xff]
  %v231 = vld [vmem:[%s1 + $0x2e0] sm:$0xff]
  %v232 = vld [vmem:[%s1 + $0x2e8] sm:$0xff]
  %v233 = vld [vmem:[%s1 + $0x2f0] sm:$0xff]
  %v234 = vld [vmem:[%s1 + $0x2f8] sm:$0xff]
  %v235 = vld [vmem:[%s1 + $0x300] sm:$0xff]
  %v236 = vld [vmem:[%s1 + $0x308] sm:$0xff]
  %v237 = vld [vmem:[%s1 + $0x310] sm:$0xff]
  %v238 = vld [vmem:[%s1 + $0x318] sm:$0xff]
  %v239 = vld [vmem:[%s1 + $0x320] sm:$0xff]
  %v240 = vld [vmem:[%s1 + $0x328] sm:$0xff]
  %v241 = vld [vmem:[%s1 + $0x330] sm:$0xff]
  %v242 = vld [vmem:[%s1 + $0x338] sm:$0xff]
  %v243 = vld [vmem:[%s1 + $0x340] sm:$0xff]
  %v244 = vld [vmem:[%s1 + $0x348] sm:$0xff]
  %v245 = vld [vmem:[%s1 + $0x350] sm:$0xff]
  %v246 = vld [vmem:[%s1 + $0x358] sm:$0xff]
  %v247 = vld [vmem:[%s1 + $0x360] sm:$0xff]
  %v248 = vld [vmem:[%s1 + $0x368] sm:$0xff]
  %v249 = vld [vmem:[%s1 + $0x370] sm:$0xff]
  %v250 = vld [vmem:[%s1 + $0x378] sm:$0xff]
  %v251 = vld [vmem:[%s1 + $0x380] sm:$0xff]
  %v252 = vld [vmem:[%s1 + $0x388] sm:$0xff]
  %v253 = vld [vmem:[%s1 + $0x390] sm:$0xff]
  %v254 = vld [vmem:[%s1 + $0x398] sm:$0xff]
  %v255 = vld [vmem:[%s1 + $0x3a0] sm:$0xff]
  %v256 = vld [vmem:[%s1 + $0x3a8] sm:$0xff]
  %v257 = vld [vmem:[%s1 + $0x3b0] sm:$0xff]
  %v258 = vld [vmem:[%s1 + $0x3b8] sm:$0xff]
  %v259 = vld [vmem:[%s1 + $0x3c0] sm:$0xff]
  %v260 = vld [vmem:[%s1 + $0x3c8] sm:$0xff]
  %v261 = vld [vmem:[%s1 + $0x3d0] sm:$0xff]
  %v262 = vld [vmem:[%s1 + $0x3d8] sm:$0xff]
  %v263 = vld [vmem:[%s1 + $0x3e0] sm:$0xff]
  %v264 = vld [vmem:[%s1 + $0x3e8] sm:$0xff]
  %v265 = vld [vmem:[%s1 + $0x3f0] sm:$0xff]
  %v266 = vld [vmem:[%s1 + $0x3f8] sm:$0xff]
  %v267 = vmul.f32 %v11, %v139
  %v268 = vmul.f32 %v12, %v140
  %v269 = vmul.f32 %v13, %v141
  %v270 = vmul.f32 %v14, %v142
  %v271 = vmul.f32 %v15, %v143
  %v272 = vmul.f32 %v16, %v144
  %v273 = vmul.f32 %v17, %v145
  %v274 = vmul.f32 %v18, %v146
  %v275 = vmul.f32 %v19, %v147
  %v276 = vmul.f32 %v20, %v148
  %v277 = vmul.f32 %v21, %v149
  %v278 = vmul.f32 %v22, %v150
  %v279 = vmul.f32 %v23, %v151
  %v280 = vmul.f32 %v24, %v152
  %v281 = vmul.f32 %v25, %v153
  %v282 = vmul.f32 %v26, %v154
  %v283 = vmul.f32 %v27, %v155
  %v284 = vmul.f32 %v28, %v156
  %v285 = vmul.f32 %v29, %v157
  %v286 = vmul.f32 %v30, %v158
  %v287 = vmul.f32 %v31, %v159
  %v288 = vmul.f32 %v32, %v160
  %v289 = vmul.f32 %v33, %v161
  %v290 = vmul.f32 %v34, %v162
  %v291 = vmul.f32 %v35, %v163
  %v292 = vmul.f32 %v36, %v164
  %v293 = vmul.f32 %v37, %v165
  %v294 = vmul.f32 %v38, %v166
  %v295 = vmul.f32 %v39, %v167
  %v296 = vmul.f32 %v40, %v168
  %v297 = vmul.f32 %v41, %v169
  %v298 = vmul.f32 %v42, %v170
  %v299 = vmul.f32 %v43, %v171
  %v300 = vmul.f32 %v44, %v172
  %v301 = vmul.f32 %v45, %v173
  %v302 = vmul.f32 %v46, %v174
  %v303 = vmul.f32 %v47, %v175
  %v304 = vmul.f32 %v48, %v176
  %v305 = vmul.f32 %v49, %v177
  %v306 = vmul.f32 %v50, %v178
  %v307 = vmul.f32 %v51, %v179
  %v308 = vmul.f32 %v52, %v180
  %v309 = vmul.f32 %v53, %v181
  %v310 = vmul.f32 %v54, %v182
  %v311 = vmul.f32 %v55, %v183
  %v312 = vmul.f32 %v56, %v184
  %v313 = vmul.f32 %v57, %v185
  %v314 = vmul.f32 %v58, %v186
  %v315 = vmul.f32 %v59, %v187
  %v316 = vmul.f32 %v60, %v188
  %v317 = vmul.f32 %v61, %v189
  %v318 = vmul.f32 %v62, %v190
  %v319 = vmul.f32 %v63, %v191
  %v320 = vmul.f32 %v64, %v192
  %v321 = vmul.f32 %v65, %v193
  %v322 = vmul.f32 %v66, %v194
  %v323 = vmul.f32 %v67, %v195
  %v324 = vmul.f32 %v68, %v196
  %v325 = vmul.f32 %v69, %v197
  %v326 = vmul.f32 %v70, %v198
  %v327 = vmul.f32 %v71, %v199
  %v328 = vmul.f32 %v72, %v200
  %v329 = vmul.f32 %v73, %v201
  %v330 = vmul.f32 %v74, %v202
  %v331 = vmul.f32 %v75, %v203
  %v332 = vmul.f32 %v76, %v204
  %v333 = vmul.f32 %v77, %v205
  %v334 = vmul.f32 %v78, %v206
  %v335 = vmul.f32 %v79, %v207
  %v336 = vmul.f32 %v80, %v208
  %v337 = vmul.f32 %v81, %v209
  %v338 = vmul.f32 %v82, %v210
  %v339 = vmul.f32 %v83, %v211
  %v340 = vmul.f32 %v84, %v212
  %v341 = vmul.f32 %v85, %v213
  %v342 = vmul.f32 %v86, %v214
  %v343 = vmul.f32 %v87, %v215
  %v344 = vmul.f32 %v88, %v216
  %v345 = vmul.f32 %v89, %v217
  %v346 = vmul.f32 %v90, %v218
  %v347 = vmul.f32 %v91, %v219
  %v348 = vmul.f32 %v92, %v220
  %v349 = vmul.f32 %v93, %v221
  %v350 = vmul.f32 %v94, %v222
  %v351 = vmul.f32 %v95, %v223
  %v352 = vmul.f32 %v96, %v224
  %v353 = vmul.f32 %v97, %v225
  %v354 = vmul.f32 %v98, %v226
  %v355 = vmul.f32 %v99, %v227
  %v356 = vmul.f32 %v100, %v228
  %v357 = vmul.f32 %v101, %v229
  %v358 = vmul.f32 %v102, %v230
  %v359 = vmul.f32 %v103, %v231
  %v360 = vmul.f32 %v104, %v232
  %v361 = vmul.f32 %v105, %v233
  %v362 = vmul.f32 %v106, %v234
  %v363 = vmul.f32 %v107, %v235
  %v364 = vmul.f32 %v108, %v236
  %v365 = vmul.f32 %v109, %v237
  %v366 = vmul.f32 %v110, %v238
  %v367 = vmul.f32 %v111, %v239
  %v368 = vmul.f32 %v112, %v240
  %v369 = vmul.f32 %v113, %v241
  %v370 = vmul.f32 %v114, %v242
  %v371 = vmul.f32 %v115, %v243
  %v372 = vmul.f32 %v116, %v244
  %v373 = vmul.f32 %v117, %v245
  %v374 = vmul.f32 %v118, %v246
  %v375 = vmul.f32 %v119, %v247
  %v376 = vmul.f32 %v120, %v248
  %v377 = vmul.f32 %v121, %v249
  %v378 = vmul.f32 %v122, %v250
  %v379 = vmul.f32 %v123, %v251
  %v380 = vmul.f32 %v124, %v252
  %v381 = vmul.f32 %v125, %v253
  %v382 = vmul.f32 %v126, %v254
  %v383 = vmul.f32 %v127, %v255
  %v384 = vmul.f32 %v128, %v256
  %v385 = vmul.f32 %v129, %v257
  %v386 = vmul.f32 %v130, %v258
  %v387 = vmul.f32 %v131, %v259
  %v388 = vmul.f32 %v132, %v260
  %v389 = vmul.f32 %v133, %v261
  %v390 = vmul.f32 %v134, %v262
  %v391 = vmul.f32 %v135, %v263
  %v392 = vmul.f32 %v136, %v264
  %v393 = vmul.f32 %v137, %v265
  %v394 = vmul.f32 %v138, %v266
  %vm395 = vcmask 261120
  %v396 = vsel %vm395, %v267, 0.0
  %397 = vadd.xlane.f32.xlu0 %v396
  %v398 = vpop.xlane.xlu0 %397
  %v399 = vsel %vm395, %v268, 0.0
  %400 = vadd.xlane.f32.xlu0 %v399
  %v401 = vpop.xlane.xlu0 %400
  %v402 = vsel %vm395, %v269, 0.0
  %403 = vadd.xlane.f32.xlu0 %v402
  %v404 = vpop.xlane.xlu0 %403
  %v405 = vsel %vm395, %v270, 0.0
  %406 = vadd.xlane.f32.xlu0 %v405
  %v407 = vpop.xlane.xlu0 %406
  %v408 = vsel %vm395, %v271, 0.0
  %409 = vadd.xlane.f32.xlu0 %v408
  %v410 = vpop.xlane.xlu0 %409
  %v411 = vsel %vm395, %v272, 0.0
  %412 = vadd.xlane.f32.xlu0 %v411
  %v413 = vpop.xlane.xlu0 %412
  %v414 = vsel %vm395, %v273, 0.0
  %415 = vadd.xlane.f32.xlu0 %v414
  %v416 = vpop.xlane.xlu0 %415
  %v417 = vsel %vm395, %v274, 0.0
  %418 = vadd.xlane.f32.xlu0 %v417
  %v419 = vpop.xlane.xlu0 %418
  %v420 = vsel %vm395, %v275, 0.0
  %421 = vadd.xlane.f32.xlu0 %v420
  %v422 = vpop.xlane.xlu0 %421
  %v423 = vsel %vm395, %v276, 0.0
  %424 = vadd.xlane.f32.xlu0 %v423
  %v425 = vpop.xlane.xlu0 %424
  %v426 = vsel %vm395, %v277, 0.0
  %427 = vadd.xlane.f32.xlu0 %v426
  %v428 = vpop.xlane.xlu0 %427
  %v429 = vsel %vm395, %v278, 0.0
  %430 = vadd.xlane.f32.xlu0 %v429
  %v431 = vpop.xlane.xlu0 %430
  %v432 = vsel %vm395, %v279, 0.0
  %433 = vadd.xlane.f32.xlu0 %v432
  %v434 = vpop.xlane.xlu0 %433
  %v435 = vsel %vm395, %v280, 0.0
  %436 = vadd.xlane.f32.xlu0 %v435
  %v437 = vpop.xlane.xlu0 %436
  %v438 = vsel %vm395, %v281, 0.0
  %439 = vadd.xlane.f32.xlu0 %v438
  %v440 = vpop.xlane.xlu0 %439
  %v441 = vsel %vm395, %v282, 0.0
  %442 = vadd.xlane.f32.xlu0 %v441
  %v443 = vpop.xlane.xlu0 %442
  %v444 = vsel %vm395, %v283, 0.0
  %445 = vadd.xlane.f32.xlu0 %v444
  %v446 = vpop.xlane.xlu0 %445
  %v447 = vsel %vm395, %v284, 0.0
  %448 = vadd.xlane.f32.xlu0 %v447
  %v449 = vpop.xlane.xlu0 %448
  %v450 = vsel %vm395, %v285, 0.0
  %451 = vadd.xlane.f32.xlu0 %v450
  %v452 = vpop.xlane.xlu0 %451
  %v453 = vsel %vm395, %v286, 0.0
  %454 = vadd.xlane.f32.xlu0 %v453
  %v455 = vpop.xlane.xlu0 %454
  %v456 = vsel %vm395, %v287, 0.0
  %457 = vadd.xlane.f32.xlu0 %v456
  %v458 = vpop.xlane.xlu0 %457
  %v459 = vsel %vm395, %v288, 0.0
  %460 = vadd.xlane.f32.xlu0 %v459
  %v461 = vpop.xlane.xlu0 %460
  %v462 = vsel %vm395, %v289, 0.0
  %463 = vadd.xlane.f32.xlu0 %v462
  %v464 = vpop.xlane.xlu0 %463
  %v465 = vsel %vm395, %v290, 0.0
  %466 = vadd.xlane.f32.xlu0 %v465
  %v467 = vpop.xlane.xlu0 %466
  %v468 = vsel %vm395, %v291, 0.0
  %469 = vadd.xlane.f32.xlu0 %v468
  %v470 = vpop.xlane.xlu0 %469
  %v471 = vsel %vm395, %v292, 0.0
  %472 = vadd.xlane.f32.xlu0 %v471
  %v473 = vpop.xlane.xlu0 %472
  %v474 = vsel %vm395, %v293, 0.0
  %475 = vadd.xlane.f32.xlu0 %v474
  %v476 = vpop.xlane.xlu0 %475
  %v477 = vsel %vm395, %v294, 0.0
  %478 = vadd.xlane.f32.xlu0 %v477
  %v479 = vpop.xlane.xlu0 %478
  %v480 = vsel %vm395, %v295, 0.0
  %481 = vadd.xlane.f32.xlu0 %v480
  %v482 = vpop.xlane.xlu0 %481
  %v483 = vsel %vm395, %v296, 0.0
  %484 = vadd.xlane.f32.xlu0 %v483
  %v485 = vpop.xlane.xlu0 %484
  %v486 = vsel %vm395, %v297, 0.0
  %487 = vadd.xlane.f32.xlu0 %v486
  %v488 = vpop.xlane.xlu0 %487
  %v489 = vsel %vm395, %v298, 0.0
  %490 = vadd.xlane.f32.xlu0 %v489
  %v491 = vpop.xlane.xlu0 %490
  %v492 = vsel %vm395, %v299, 0.0
  %493 = vadd.xlane.f32.xlu0 %v492
  %v494 = vpop.xlane.xlu0 %493
  %v495 = vsel %vm395, %v300, 0.0
  %496 = vadd.xlane.f32.xlu0 %v495
  %v497 = vpop.xlane.xlu0 %496
  %v498 = vsel %vm395, %v301, 0.0
  %499 = vadd.xlane.f32.xlu0 %v498
  %v500 = vpop.xlane.xlu0 %499
  %v501 = vsel %vm395, %v302, 0.0
  %502 = vadd.xlane.f32.xlu0 %v501
  %v503 = vpop.xlane.xlu0 %502
  %v504 = vsel %vm395, %v303, 0.0
  %505 = vadd.xlane.f32.xlu0 %v504
  %v506 = vpop.xlane.xlu0 %505
  %v507 = vsel %vm395, %v304, 0.0
  %508 = vadd.xlane.f32.xlu0 %v507
  %v509 = vpop.xlane.xlu0 %508
  %v510 = vsel %vm395, %v305, 0.0
  %511 = vadd.xlane.f32.xlu0 %v510
  %v512 = vpop.xlane.xlu0 %511
  %v513 = vsel %vm395, %v306, 0.0
  %514 = vadd.xlane.f32.xlu0 %v513
  %v515 = vpop.xlane.xlu0 %514
  %v516 = vsel %vm395, %v307, 0.0
  %517 = vadd.xlane.f32.xlu0 %v516
  %v518 = vpop.xlane.xlu0 %517
  %v519 = vsel %vm395, %v308, 0.0
  %520 = vadd.xlane.f32.xlu0 %v519
  %v521 = vpop.xlane.xlu0 %520
  %v522 = vsel %vm395, %v309, 0.0
  %523 = vadd.xlane.f32.xlu0 %v522
  %v524 = vpop.xlane.xlu0 %523
  %v525 = vsel %vm395, %v310, 0.0
  %526 = vadd.xlane.f32.xlu0 %v525
  %v527 = vpop.xlane.xlu0 %526
  %v528 = vsel %vm395, %v311, 0.0
  %529 = vadd.xlane.f32.xlu0 %v528
  %v530 = vpop.xlane.xlu0 %529
  %v531 = vsel %vm395, %v312, 0.0
  %532 = vadd.xlane.f32.xlu0 %v531
  %v533 = vpop.xlane.xlu0 %532
  %v534 = vsel %vm395, %v313, 0.0
  %535 = vadd.xlane.f32.xlu0 %v534
  %v536 = vpop.xlane.xlu0 %535
  %v537 = vsel %vm395, %v314, 0.0
  %538 = vadd.xlane.f32.xlu0 %v537
  %v539 = vpop.xlane.xlu0 %538
  %v540 = vsel %vm395, %v315, 0.0
  %541 = vadd.xlane.f32.xlu0 %v540
  %v542 = vpop.xlane.xlu0 %541
  %v543 = vsel %vm395, %v316, 0.0
  %544 = vadd.xlane.f32.xlu0 %v543
  %v545 = vpop.xlane.xlu0 %544
  %v546 = vsel %vm395, %v317, 0.0
  %547 = vadd.xlane.f32.xlu0 %v546
  %v548 = vpop.xlane.xlu0 %547
  %v549 = vsel %vm395, %v318, 0.0
  %550 = vadd.xlane.f32.xlu0 %v549
  %v551 = vpop.xlane.xlu0 %550
  %v552 = vsel %vm395, %v319, 0.0
  %553 = vadd.xlane.f32.xlu0 %v552
  %v554 = vpop.xlane.xlu0 %553
  %v555 = vsel %vm395, %v320, 0.0
  %556 = vadd.xlane.f32.xlu0 %v555
  %v557 = vpop.xlane.xlu0 %556
  %v558 = vsel %vm395, %v321, 0.0
  %559 = vadd.xlane.f32.xlu0 %v558
  %v560 = vpop.xlane.xlu0 %559
  %v561 = vsel %vm395, %v322, 0.0
  %562 = vadd.xlane.f32.xlu0 %v561
  %v563 = vpop.xlane.xlu0 %562
  %v564 = vsel %vm395, %v323, 0.0
  %565 = vadd.xlane.f32.xlu0 %v564
  %v566 = vpop.xlane.xlu0 %565
  %v567 = vsel %vm395, %v324, 0.0
  %568 = vadd.xlane.f32.xlu0 %v567
  %v569 = vpop.xlane.xlu0 %568
  %v570 = vsel %vm395, %v325, 0.0
  %571 = vadd.xlane.f32.xlu0 %v570
  %v572 = vpop.xlane.xlu0 %571
  %v573 = vsel %vm395, %v326, 0.0
  %574 = vadd.xlane.f32.xlu0 %v573
  %v575 = vpop.xlane.xlu0 %574
  %v576 = vsel %vm395, %v327, 0.0
  %577 = vadd.xlane.f32.xlu0 %v576
  %v578 = vpop.xlane.xlu0 %577
  %v579 = vsel %vm395, %v328, 0.0
  %580 = vadd.xlane.f32.xlu0 %v579
  %v581 = vpop.xlane.xlu0 %580
  %v582 = vsel %vm395, %v329, 0.0
  %583 = vadd.xlane.f32.xlu0 %v582
  %v584 = vpop.xlane.xlu0 %583
  %v585 = vsel %vm395, %v330, 0.0
  %586 = vadd.xlane.f32.xlu0 %v585
  %v587 = vpop.xlane.xlu0 %586
  %v588 = vsel %vm395, %v331, 0.0
  %589 = vadd.xlane.f32.xlu0 %v588
  %v590 = vpop.xlane.xlu0 %589
  %v591 = vsel %vm395, %v332, 0.0
  %592 = vadd.xlane.f32.xlu0 %v591
  %v593 = vpop.xlane.xlu0 %592
  %v594 = vsel %vm395, %v333, 0.0
  %595 = vadd.xlane.f32.xlu0 %v594
  %v596 = vpop.xlane.xlu0 %595
  %v597 = vsel %vm395, %v334, 0.0
  %598 = vadd.xlane.f32.xlu0 %v597
  %v599 = vpop.xlane.xlu0 %598
  %v600 = vsel %vm395, %v335, 0.0
  %601 = vadd.xlane.f32.xlu0 %v600
  %v602 = vpop.xlane.xlu0 %601
  %v603 = vsel %vm395, %v336, 0.0
  %604 = vadd.xlane.f32.xlu0 %v603
  %v605 = vpop.xlane.xlu0 %604
  %v606 = vsel %vm395, %v337, 0.0
  %607 = vadd.xlane.f32.xlu0 %v606
  %v608 = vpop.xlane.xlu0 %607
  %v609 = vsel %vm395, %v338, 0.0
  %610 = vadd.xlane.f32.xlu0 %v609
  %v611 = vpop.xlane.xlu0 %610
  %v612 = vsel %vm395, %v339, 0.0
  %613 = vadd.xlane.f32.xlu0 %v612
  %v614 = vpop.xlane.xlu0 %613
  %v615 = vsel %vm395, %v340, 0.0
  %616 = vadd.xlane.f32.xlu0 %v615
  %v617 = vpop.xlane.xlu0 %616
  %v618 = vsel %vm395, %v341, 0.0
  %619 = vadd.xlane.f32.xlu0 %v618
  %v620 = vpop.xlane.xlu0 %619
  %v621 = vsel %vm395, %v342, 0.0
  %622 = vadd.xlane.f32.xlu0 %v621
  %v623 = vpop.xlane.xlu0 %622
  %v624 = vsel %vm395, %v343, 0.0
  %625 = vadd.xlane.f32.xlu0 %v624
  %v626 = vpop.xlane.xlu0 %625
  %v627 = vsel %vm395, %v344, 0.0
  %628 = vadd.xlane.f32.xlu0 %v627
  %v629 = vpop.xlane.xlu0 %628
  %v630 = vsel %vm395, %v345, 0.0
  %631 = vadd.xlane.f32.xlu0 %v630
  %v632 = vpop.xlane.xlu0 %631
  %v633 = vsel %vm395, %v346, 0.0
  %634 = vadd.xlane.f32.xlu0 %v633
  %v635 = vpop.xlane.xlu0 %634
  %v636 = vsel %vm395, %v347, 0.0
  %637 = vadd.xlane.f32.xlu0 %v636
  %v638 = vpop.xlane.xlu0 %637
  %v639 = vsel %vm395, %v348, 0.0
  %640 = vadd.xlane.f32.xlu0 %v639
  %v641 = vpop.xlane.xlu0 %640
  %v642 = vsel %vm395, %v349, 0.0
  %643 = vadd.xlane.f32.xlu0 %v642
  %v644 = vpop.xlane.xlu0 %643
  %v645 = vsel %vm395, %v350, 0.0
  %646 = vadd.xlane.f32.xlu0 %v645
  %v647 = vpop.xlane.xlu0 %646
  %v648 = vsel %vm395, %v351, 0.0
  %649 = vadd.xlane.f32.xlu0 %v648
  %v650 = vpop.xlane.xlu0 %649
  %v651 = vsel %vm395, %v352, 0.0
  %652 = vadd.xlane.f32.xlu0 %v651
  %v653 = vpop.xlane.xlu0 %652
  %v654 = vsel %vm395, %v353, 0.0
  %655 = vadd.xlane.f32.xlu0 %v654
  %v656 = vpop.xlane.xlu0 %655
  %v657 = vsel %vm395, %v354, 0.0
  %658 = vadd.xlane.f32.xlu0 %v657
  %v659 = vpop.xlane.xlu0 %658
  %v660 = vsel %vm395, %v355, 0.0
  %661 = vadd.xlane.f32.xlu0 %v660
  %v662 = vpop.xlane.xlu0 %661
  %v663 = vsel %vm395, %v356, 0.0
  %664 = vadd.xlane.f32.xlu0 %v663
  %v665 = vpop.xlane.xlu0 %664
  %v666 = vsel %vm395, %v357, 0.0
  %667 = vadd.xlane.f32.xlu0 %v666
  %v668 = vpop.xlane.xlu0 %667
  %v669 = vsel %vm395, %v358, 0.0
  %670 = vadd.xlane.f32.xlu0 %v669
  %v671 = vpop.xlane.xlu0 %670
  %v672 = vsel %vm395, %v359, 0.0
  %673 = vadd.xlane.f32.xlu0 %v672
  %v674 = vpop.xlane.xlu0 %673
  %v675 = vsel %vm395, %v360, 0.0
  %676 = vadd.xlane.f32.xlu0 %v675
  %v677 = vpop.xlane.xlu0 %676
  %v678 = vsel %vm395, %v361, 0.0
  %679 = vadd.xlane.f32.xlu0 %v678
  %v680 = vpop.xlane.xlu0 %679
  %v681 = vsel %vm395, %v362, 0.0
  %682 = vadd.xlane.f32.xlu0 %v681
  %v683 = vpop.xlane.xlu0 %682
  %v684 = vsel %vm395, %v363, 0.0
  %685 = vadd.xlane.f32.xlu0 %v684
  %v686 = vpop.xlane.xlu0 %685
  %v687 = vsel %vm395, %v364, 0.0
  %688 = vadd.xlane.f32.xlu0 %v687
  %v689 = vpop.xlane.xlu0 %688
  %v690 = vsel %vm395, %v365, 0.0
  %691 = vadd.xlane.f32.xlu0 %v690
  %v692 = vpop.xlane.xlu0 %691
  %v693 = vsel %vm395, %v366, 0.0
  %694 = vadd.xlane.f32.xlu0 %v693
  %v695 = vpop.xlane.xlu0 %694
  %v696 = vsel %vm395, %v367, 0.0
  %697 = vadd.xlane.f32.xlu0 %v696
  %v698 = vpop.xlane.xlu0 %697
  %v699 = vsel %vm395, %v368, 0.0
  %700 = vadd.xlane.f32.xlu0 %v699
  %v701 = vpop.xlane.xlu0 %700
  %v702 = vsel %vm395, %v369, 0.0
  %703 = vadd.xlane.f32.xlu0 %v702
  %v704 = vpop.xlane.xlu0 %703
  %v705 = vsel %vm395, %v370, 0.0
  %706 = vadd.xlane.f32.xlu0 %v705
  %v707 = vpop.xlane.xlu0 %706
  %v708 = vsel %vm395, %v371, 0.0
  %709 = vadd.xlane.f32.xlu0 %v708
  %v710 = vpop.xlane.xlu0 %709
  %v711 = vsel %vm395, %v372, 0.0
  %712 = vadd.xlane.f32.xlu0 %v711
  %v713 = vpop.xlane.xlu0 %712
  %v714 = vsel %vm395, %v373, 0.0
  %715 = vadd.xlane.f32.xlu0 %v714
  %v716 = vpop.xlane.xlu0 %715
  %v717 = vsel %vm395, %v374, 0.0
  %718 = vadd.xlane.f32.xlu0 %v717
  %v719 = vpop.xlane.xlu0 %718
  %v720 = vsel %vm395, %v375, 0.0
  %721 = vadd.xlane.f32.xlu0 %v720
  %v722 = vpop.xlane.xlu0 %721
  %v723 = vsel %vm395, %v376, 0.0
  %724 = vadd.xlane.f32.xlu0 %v723
  %v725 = vpop.xlane.xlu0 %724
  %v726 = vsel %vm395, %v377, 0.0
  %727 = vadd.xlane.f32.xlu0 %v726
  %v728 = vpop.xlane.xlu0 %727
  %v729 = vsel %vm395, %v378, 0.0
  %730 = vadd.xlane.f32.xlu0 %v729
  %v731 = vpop.xlane.xlu0 %730
  %v732 = vsel %vm395, %v379, 0.0
  %733 = vadd.xlane.f32.xlu0 %v732
  %v734 = vpop.xlane.xlu0 %733
  %v735 = vsel %vm395, %v380, 0.0
  %736 = vadd.xlane.f32.xlu0 %v735
  %v737 = vpop.xlane.xlu0 %736
  %v738 = vsel %vm395, %v381, 0.0
  %739 = vadd.xlane.f32.xlu0 %v738
  %v740 = vpop.xlane.xlu0 %739
  %v741 = vsel %vm395, %v382, 0.0
  %742 = vadd.xlane.f32.xlu0 %v741
  %v743 = vpop.xlane.xlu0 %742
  %v744 = vsel %vm395, %v383, 0.0
  %745 = vadd.xlane.f32.xlu0 %v744
  %v746 = vpop.xlane.xlu0 %745
  %v747 = vsel %vm395, %v384, 0.0
  %748 = vadd.xlane.f32.xlu0 %v747
  %v749 = vpop.xlane.xlu0 %748
  %v750 = vsel %vm395, %v385, 0.0
  %751 = vadd.xlane.f32.xlu0 %v750
  %v752 = vpop.xlane.xlu0 %751
  %v753 = vsel %vm395, %v386, 0.0
  %754 = vadd.xlane.f32.xlu0 %v753
  %v755 = vpop.xlane.xlu0 %754
  %v756 = vsel %vm395, %v387, 0.0
  %757 = vadd.xlane.f32.xlu0 %v756
  %v758 = vpop.xlane.xlu0 %757
  %v759 = vsel %vm395, %v388, 0.0
  %760 = vadd.xlane.f32.xlu0 %v759
  %v761 = vpop.xlane.xlu0 %760
  %v762 = vsel %vm395, %v389, 0.0
  %763 = vadd.xlane.f32.xlu0 %v762
  %v764 = vpop.xlane.xlu0 %763
  %v765 = vsel %vm395, %v390, 0.0
  %766 = vadd.xlane.f32.xlu0 %v765
  %v767 = vpop.xlane.xlu0 %766
  %v768 = vsel %vm395, %v391, 0.0
  %769 = vadd.xlane.f32.xlu0 %v768
  %v770 = vpop.xlane.xlu0 %769
  %v771 = vsel %vm395, %v392, 0.0
  %772 = vadd.xlane.f32.xlu0 %v771
  %v773 = vpop.xlane.xlu0 %772
  %v774 = vsel %vm395, %v393, 0.0
  %775 = vadd.xlane.f32.xlu0 %v774
  %v776 = vpop.xlane.xlu0 %775
  %v777 = vsel %vm395, %v394, 0.0
  %778 = vadd.xlane.f32.xlu0 %v777
  %v779 = vpop.xlane.xlu0 %778
  %v908 = vlaneseq
  %v909 = vand.u32 %v908, 127
  %v910 = vperm.slane %v398, %v909
  %v911 = vadd.s32 %v909, 4294967288
  %v912 = vperm.slane %v401, %v911
  %vm913 = vcmask 130112
  %v914 = vsel %vm913, %v912, %v910
  %v915 = vadd.s32 %v909, 4294967280
  %v916 = vperm.slane %v404, %v915
  %vm917 = vcmask 195712
  %v918 = vsel %vm917, %v916, %v914
  %v919 = vadd.s32 %v909, 4294967272
  %v920 = vperm.slane %v407, %v919
  %vm921 = vcmask 261312
  %v922 = vsel %vm921, %v920, %v918
  %v923 = vadd.s32 %v909, 4294967264
  %v924 = vperm.slane %v410, %v923
  %vm925 = vcmask 326912
  %v926 = vsel %vm925, %v924, %v922
  %v927 = vadd.s32 %v909, 4294967256
  %v928 = vperm.slane %v413, %v927
  %vm929 = vcmask 392512
  %v930 = vsel %vm929, %v928, %v926
  %v931 = vadd.s32 %v909, 4294967248
  %v932 = vperm.slane %v416, %v931
  %vm933 = vcmask 458112
  %v934 = vsel %vm933, %v932, %v930
  %v935 = vadd.s32 %v909, 4294967240
  %v936 = vperm.slane %v419, %v935
  %vm937 = vcmask 523712
  %v938 = vsel %vm937, %v936, %v934
  %v939 = vadd.s32 %v909, 4294967232
  %v940 = vperm.slane %v422, %v939
  %vm941 = vcmask 589312
  %v942 = vsel %vm941, %v940, %v938
  %v943 = vadd.s32 %v909, 4294967224
  %v944 = vperm.slane %v425, %v943
  %vm945 = vcmask 654912
  %v946 = vsel %vm945, %v944, %v942
  %v947 = vadd.s32 %v909, 4294967216
  %v948 = vperm.slane %v428, %v947
  %vm949 = vcmask 720512
  %v950 = vsel %vm949, %v948, %v946
  %v951 = vadd.s32 %v909, 4294967208
  %v952 = vperm.slane %v431, %v951
  %vm953 = vcmask 786112
  %v954 = vsel %vm953, %v952, %v950
  %v955 = vadd.s32 %v909, 4294967200
  %v956 = vperm.slane %v434, %v955
  %vm957 = vcmask 851712
  %v958 = vsel %vm957, %v956, %v954
  %v959 = vadd.s32 %v909, 4294967192
  %v960 = vperm.slane %v437, %v959
  %vm961 = vcmask 917312
  %v962 = vsel %vm961, %v960, %v958
  %v963 = vadd.s32 %v909, 4294967184
  %v964 = vperm.slane %v440, %v963
  %vm965 = vcmask 982912
  %v966 = vsel %vm965, %v964, %v962
  %v967 = vadd.s32 %v909, 4294967176
  %v968 = vperm.slane %v443, %v967
  %vm969 = vcmask 1048512
  %v970 = vsel %vm969, %v968, %v966
  %v971 = vperm.slane %v446, %v909
  %v972 = vperm.slane %v449, %v911
  %v973 = vsel %vm913, %v972, %v971
  %v974 = vperm.slane %v452, %v915
  %v975 = vsel %vm917, %v974, %v973
  %v976 = vperm.slane %v455, %v919
  %v977 = vsel %vm921, %v976, %v975
  %v978 = vperm.slane %v458, %v923
  %v979 = vsel %vm925, %v978, %v977
  %v980 = vperm.slane %v461, %v927
  %v981 = vsel %vm929, %v980, %v979
  %v982 = vperm.slane %v464, %v931
  %v983 = vsel %vm933, %v982, %v981
  %v984 = vperm.slane %v467, %v935
  %v985 = vsel %vm937, %v984, %v983
  %v986 = vperm.slane %v470, %v939
  %v987 = vsel %vm941, %v986, %v985
  %v988 = vperm.slane %v473, %v943
  %v989 = vsel %vm945, %v988, %v987
  %v990 = vperm.slane %v476, %v947
  %v991 = vsel %vm949, %v990, %v989
  %v992 = vperm.slane %v479, %v951
  %v993 = vsel %vm953, %v992, %v991
  %v994 = vperm.slane %v482, %v955
  %v995 = vsel %vm957, %v994, %v993
  %v996 = vperm.slane %v485, %v959
  %v997 = vsel %vm961, %v996, %v995
  %v998 = vperm.slane %v488, %v963
  %v999 = vsel %vm965, %v998, %v997
  %v1000 = vperm.slane %v491, %v967
  %v1001 = vsel %vm969, %v1000, %v999
  %v1002 = vperm.slane %v494, %v909
  %v1003 = vperm.slane %v497, %v911
  %v1004 = vsel %vm913, %v1003, %v1002
  %v1005 = vperm.slane %v500, %v915
  %v1006 = vsel %vm917, %v1005, %v1004
  %v1007 = vperm.slane %v503, %v919
  %v1008 = vsel %vm921, %v1007, %v1006
  %v1009 = vperm.slane %v506, %v923
  %v1010 = vsel %vm925, %v1009, %v1008
  %v1011 = vperm.slane %v509, %v927
  %v1012 = vsel %vm929, %v1011, %v1010
  %v1013 = vperm.slane %v512, %v931
  %v1014 = vsel %vm933, %v1013, %v1012
  %v1015 = vperm.slane %v515, %v935
  %v1016 = vsel %vm937, %v1015, %v1014
  %v1017 = vperm.slane %v518, %v939
  %v1018 = vsel %vm941, %v1017, %v1016
  %v1019 = vperm.slane %v521, %v943
  %v1020 = vsel %vm945, %v1019, %v1018
  %v1021 = vperm.slane %v524, %v947
  %v1022 = vsel %vm949, %v1021, %v1020
  %v1023 = vperm.slane %v527, %v951
  %v1024 = vsel %vm953, %v1023, %v1022
  %v1025 = vperm.slane %v530, %v955
  %v1026 = vsel %vm957, %v1025, %v1024
  %v1027 = vperm.slane %v533, %v959
  %v1028 = vsel %vm961, %v1027, %v1026
  %v1029 = vperm.slane %v536, %v963
  %v1030 = vsel %vm965, %v1029, %v1028
  %v1031 = vperm.slane %v539, %v967
  %v1032 = vsel %vm969, %v1031, %v1030
  %v1033 = vperm.slane %v542, %v909
  %v1034 = vperm.slane %v545, %v911
  %v1035 = vsel %vm913, %v1034, %v1033
  %v1036 = vperm.slane %v548, %v915
  %v1037 = vsel %vm917, %v1036, %v1035
  %v1038 = vperm.slane %v551, %v919
  %v1039 = vsel %vm921, %v1038, %v1037
  %v1040 = vperm.slane %v554, %v923
  %v1041 = vsel %vm925, %v1040, %v1039
  %v1042 = vperm.slane %v557, %v927
  %v1043 = vsel %vm929, %v1042, %v1041
  %v1044 = vperm.slane %v560, %v931
  %v1045 = vsel %vm933, %v1044, %v1043
  %v1046 = vperm.slane %v563, %v935
  %v1047 = vsel %vm937, %v1046, %v1045
  %v1048 = vperm.slane %v566, %v939
  %v1049 = vsel %vm941, %v1048, %v1047
  %v1050 = vperm.slane %v569, %v943
  %v1051 = vsel %vm945, %v1050, %v1049
  %v1052 = vperm.slane %v572, %v947
  %v1053 = vsel %vm949, %v1052, %v1051
  %v1054 = vperm.slane %v575, %v951
  %v1055 = vsel %vm953, %v1054, %v1053
  %v1056 = vperm.slane %v578, %v955
  %v1057 = vsel %vm957, %v1056, %v1055
  %v1058 = vperm.slane %v581, %v959
  %v1059 = vsel %vm961, %v1058, %v1057
  %v1060 = vperm.slane %v584, %v963
  %v1061 = vsel %vm965, %v1060, %v1059
  %v1062 = vperm.slane %v587, %v967
  %v1063 = vsel %vm969, %v1062, %v1061
  %v1064 = vperm.slane %v590, %v909
  %v1065 = vperm.slane %v593, %v911
  %v1066 = vsel %vm913, %v1065, %v1064
  %v1067 = vperm.slane %v596, %v915
  %v1068 = vsel %vm917, %v1067, %v1066
  %v1069 = vperm.slane %v599, %v919
  %v1070 = vsel %vm921, %v1069, %v1068
  %v1071 = vperm.slane %v602, %v923
  %v1072 = vsel %vm925, %v1071, %v1070
  %v1073 = vperm.slane %v605, %v927
  %v1074 = vsel %vm929, %v1073, %v1072
  %v1075 = vperm.slane %v608, %v931
  %v1076 = vsel %vm933, %v1075, %v1074
  %v1077 = vperm.slane %v611, %v935
  %v1078 = vsel %vm937, %v1077, %v1076
  %v1079 = vperm.slane %v614, %v939
  %v1080 = vsel %vm941, %v1079, %v1078
  %v1081 = vperm.slane %v617, %v943
  %v1082 = vsel %vm945, %v1081, %v1080
  %v1083 = vperm.slane %v620, %v947
  %v1084 = vsel %vm949, %v1083, %v1082
  %v1085 = vperm.slane %v623, %v951
  %v1086 = vsel %vm953, %v1085, %v1084
  %v1087 = vperm.slane %v626, %v955
  %v1088 = vsel %vm957, %v1087, %v1086
  %v1089 = vperm.slane %v629, %v959
  %v1090 = vsel %vm961, %v1089, %v1088
  %v1091 = vperm.slane %v632, %v963
  %v1092 = vsel %vm965, %v1091, %v1090
  %v1093 = vperm.slane %v635, %v967
  %v1094 = vsel %vm969, %v1093, %v1092
  %v1095 = vperm.slane %v638, %v909
  %v1096 = vperm.slane %v641, %v911
  %v1097 = vsel %vm913, %v1096, %v1095
  %v1098 = vperm.slane %v644, %v915
  %v1099 = vsel %vm917, %v1098, %v1097
  %v1100 = vperm.slane %v647, %v919
  %v1101 = vsel %vm921, %v1100, %v1099
  %v1102 = vperm.slane %v650, %v923
  %v1103 = vsel %vm925, %v1102, %v1101
  %v1104 = vperm.slane %v653, %v927
  %v1105 = vsel %vm929, %v1104, %v1103
  %v1106 = vperm.slane %v656, %v931
  %v1107 = vsel %vm933, %v1106, %v1105
  %v1108 = vperm.slane %v659, %v935
  %v1109 = vsel %vm937, %v1108, %v1107
  %v1110 = vperm.slane %v662, %v939
  %v1111 = vsel %vm941, %v1110, %v1109
  %v1112 = vperm.slane %v665, %v943
  %v1113 = vsel %vm945, %v1112, %v1111
  %v1114 = vperm.slane %v668, %v947
  %v1115 = vsel %vm949, %v1114, %v1113
  %v1116 = vperm.slane %v671, %v951
  %v1117 = vsel %vm953, %v1116, %v1115
  %v1118 = vperm.slane %v674, %v955
  %v1119 = vsel %vm957, %v1118, %v1117
  %v1120 = vperm.slane %v677, %v959
  %v1121 = vsel %vm961, %v1120, %v1119
  %v1122 = vperm.slane %v680, %v963
  %v1123 = vsel %vm965, %v1122, %v1121
  %v1124 = vperm.slane %v683, %v967
  %v1125 = vsel %vm969, %v1124, %v1123
  %v1126 = vperm.slane %v686, %v909
  %v1127 = vperm.slane %v689, %v911
  %v1128 = vsel %vm913, %v1127, %v1126
  %v1129 = vperm.slane %v692, %v915
  %v1130 = vsel %vm917, %v1129, %v1128
  %v1131 = vperm.slane %v695, %v919
  %v1132 = vsel %vm921, %v1131, %v1130
  %v1133 = vperm.slane %v698, %v923
  %v1134 = vsel %vm925, %v1133, %v1132
  %v1135 = vperm.slane %v701, %v927
  %v1136 = vsel %vm929, %v1135, %v1134
  %v1137 = vperm.slane %v704, %v931
  %v1138 = vsel %vm933, %v1137, %v1136
  %v1139 = vperm.slane %v707, %v935
  %v1140 = vsel %vm937, %v1139, %v1138
  %v1141 = vperm.slane %v710, %v939
  %v1142 = vsel %vm941, %v1141, %v1140
  %v1143 = vperm.slane %v713, %v943
  %v1144 = vsel %vm945, %v1143, %v1142
  %v1145 = vperm.slane %v716, %v947
  %v1146 = vsel %vm949, %v1145, %v1144
  %v1147 = vperm.slane %v719, %v951
  %v1148 = vsel %vm953, %v1147, %v1146
  %v1149 = vperm.slane %v722, %v955
  %v1150 = vsel %vm957, %v1149, %v1148
  %v1151 = vperm.slane %v725, %v959
  %v1152 = vsel %vm961, %v1151, %v1150
  %v1153 = vperm.slane %v728, %v963
  %v1154 = vsel %vm965, %v1153, %v1152
  %v1155 = vperm.slane %v731, %v967
  %v1156 = vsel %vm969, %v1155, %v1154
  %v1157 = vperm.slane %v734, %v909
  %v1158 = vperm.slane %v737, %v911
  %v1159 = vsel %vm913, %v1158, %v1157
  %v1160 = vperm.slane %v740, %v915
  %v1161 = vsel %vm917, %v1160, %v1159
  %v1162 = vperm.slane %v743, %v919
  %v1163 = vsel %vm921, %v1162, %v1161
  %v1164 = vperm.slane %v746, %v923
  %v1165 = vsel %vm925, %v1164, %v1163
  %v1166 = vperm.slane %v749, %v927
  %v1167 = vsel %vm929, %v1166, %v1165
  %v1168 = vperm.slane %v752, %v931
  %v1169 = vsel %vm933, %v1168, %v1167
  %v1170 = vperm.slane %v755, %v935
  %v1171 = vsel %vm937, %v1170, %v1169
  %v1172 = vperm.slane %v758, %v939
  %v1173 = vsel %vm941, %v1172, %v1171
  %v1174 = vperm.slane %v761, %v943
  %v1175 = vsel %vm945, %v1174, %v1173
  %v1176 = vperm.slane %v764, %v947
  %v1177 = vsel %vm949, %v1176, %v1175
  %v1178 = vperm.slane %v767, %v951
  %v1179 = vsel %vm953, %v1178, %v1177
  %v1180 = vperm.slane %v770, %v955
  %v1181 = vsel %vm957, %v1180, %v1179
  %v1182 = vperm.slane %v773, %v959
  %v1183 = vsel %vm961, %v1182, %v1181
  %v1184 = vperm.slane %v776, %v963
  %v1185 = vsel %vm965, %v1184, %v1183
  %v1186 = vperm.slane %v779, %v967
  %v1187 = vsel %vm969, %v1186, %v1185
  %vm1188 = vcmask 1041409
  %v1189 = vsel %vm1188, %v1001, %v970
  %vm1190 = vcmask 1042434
  %v1191 = vsel %vm1190, %v1032, %v1189
  %vm1192 = vcmask 1043459
  %v1193 = vsel %vm1192, %v1063, %v1191
  %vm1194 = vcmask 1044484
  %v1195 = vsel %vm1194, %v1094, %v1193
  %vm1196 = vcmask 1045509
  %v1197 = vsel %vm1196, %v1125, %v1195
  %vm1198 = vcmask 1046534
  %v1199 = vsel %vm1198, %v1156, %v1197
  %vm1200 = vcmask 1047559
  %v1201 = vsel %vm1200, %v1187, %v1199
  %1203 = vst [vmem:[%s2] sm:$0xff] %v1201
  // Predicated region
  $region10: #{forward.1} parent=0 // pred_check
    _
  $region11: #{forward.1} parent=0 // pred_check_branch
    %1205 = sbr.rel (0) target = $region13
  $region12: #{forward.1} parent=0 // pred_region
    _
  $region13: #{forward.1} parent=0 // pred_fallthru
    _
  // Predicated region
  $region14: #{forward.1} parent=0 // pred_check
    _
  $region15: #{forward.1} parent=0 // pred_check_branch
    %1207 = sbr.rel (0) target = $region17
  $region16: #{forward.1} parent=0 // pred_region
    _
  $region17: #{forward.1} parent=0 // pred_fallthru
    _

</llo_original>
